<compile_context>
chip_gen: v7x
topology: tpu7x:2x2x1
jax: 0.10.0
libtpu: 0.0.40
codegen_flags: <defaults>
</compile_context>

<pallas_src>
import functools

import jax
import jax.numpy as jnp
from jax.experimental import pallas as pl
from jax.experimental.pallas import tpu as pltpu


def _cdiv(a, b):
    return (a + b - 1) // b


def ce_kernel(logits_ref, target_ref, tw_ref, out_ref, num_acc, den_acc,
              *, n_rows, tn, tiles_per_split):
    s = pl.program_id(0)   # batch split (parallel; 2-TC shard on v7x)
    t = pl.program_id(1)   # row tile within split (streaming reduction)

    @pl.when(t == 0)
    def _init():
        num_acc[...] = jnp.zeros_like(num_acc)
        den_acc[...] = jnp.zeros_like(den_acc)

    logits = logits_ref[...].astype(jnp.float32)     # (tn, C)
    tgt = target_ref[...]                            # (tn, 1) int32
    w_i = tw_ref[...].astype(jnp.float32)            # (tn, 1) target-class weight
    rows, ncls = logits.shape

    # Numerically-stable log-sum-exp over the class axis (full-width block, so
    # no lane masking needed; Mosaic masks physical lane padding internally).
    m = jnp.max(logits, axis=-1, keepdims=True)                       # (tn, 1)
    lse = jnp.log(jnp.sum(jnp.exp(logits - m), axis=-1, keepdims=True))

    # Gather target logit via one-hot select (no log-prob materialization).
    cls = jax.lax.broadcasted_iota(jnp.int32, (rows, ncls), 1)
    g_logit = jnp.sum(jnp.where(cls == tgt, logits, 0.0),
                      axis=-1, keepdims=True)                         # (tn, 1)
    nll = (m + lse) - g_logit                                         # (tn, 1)

    # Mask rows beyond N (grid over-coverage / undefined partial-tile padding).
    # Masking nll as well kills any NaN/Inf coming from undefined padding data.
    row = ((s * tiles_per_split + t) * tn
           + jax.lax.broadcasted_iota(jnp.int32, (rows, 1), 0))
    valid = row < n_rows
    w_i = jnp.where(valid, w_i, 0.0)
    nll = jnp.where(valid, nll, 0.0)

    num_acc[...] += jnp.sum(w_i * nll, axis=0, keepdims=True)         # (1, 1)
    den_acc[...] += jnp.sum(w_i, axis=0, keepdims=True)               # (1, 1)

    @pl.when(t == tiles_per_split - 1)
    def _finalize():
        sub = jax.lax.broadcasted_iota(jnp.int32, (8, 128), 0)
        lane = jax.lax.broadcasted_iota(jnp.int32, (8, 128), 1)
        out_ref[...] = (jnp.where((sub == 0) & (lane == 0), num_acc[...], 0.0)
                        + jnp.where((sub == 0) & (lane == 1), den_acc[...], 0.0))


def weighted_cross_entropy(logits, target, class_weight, *,
                           num_splits=1, block_rows=None,
                           tile_bytes_target=3 * 1024 * 1024):
    """logits: (N, C) float, target: (N,) int, class_weight: (C,) float."""
    N, C = logits.shape
    itemsize = jnp.dtype(logits.dtype).itemsize

    target = target.astype(jnp.int32).reshape(N, 1)
    # Per-row target-class weight precomputed here (trivially cheap gather) so
    # the kernel avoids a full (tn, C) select + cross-lane reduction per tile.
    class_weight = class_weight.astype(jnp.float32)
    tw = class_weight[target[:, 0]].reshape(N, 1)

    # Row-tile size: byte-target driven, multiple of 8, never exceeding N.
    if block_rows is not None:
        tn = int(block_rows)
    else:
        tn = max(8, (tile_bytes_target // max(1, C * itemsize)) // 8 * 8)
    if N < 8:
        tn = N                                  # block == full row dim (legal)
    else:
        tn = max(8, min(tn, (N // 8) * 8))
        tn = (tn // 8) * 8

    total_tiles = _cdiv(N, tn)
    ns = max(1, min(num_splits, total_tiles))
    tps = _cdiv(total_tiles, ns)
    last_tile = total_tiles - 1

    def row_block(s, t):
        # Clamp so over-covered tiles re-read the last valid block; their
        # contribution is zeroed by the in-kernel row mask.
        return (jnp.minimum(s * tps + t, last_tile), 0)

    kernel = functools.partial(ce_kernel, n_rows=N, tn=tn, tiles_per_split=tps)

    cost = pl.CostEstimate(
        flops=6 * N * C,
        transcendentals=N * C + N,
        bytes_accessed=N * C * itemsize + N * 8 + ns * 8 * 128 * 4,
    )

    parts = pl.pallas_call(
        kernel,
        out_shape=jax.ShapeDtypeStruct((ns * 8, 128), jnp.float32),
        grid=(ns, tps),
        in_specs=[
            pl.BlockSpec((tn, C), row_block),    # logits tile (full class width)
            pl.BlockSpec((tn, 1), row_block),    # targets
            pl.BlockSpec((tn, 1), row_block),    # per-row target weight
        ],
        out_specs=pl.BlockSpec((8, 128), lambda s, t: (s, 0)),
        scratch_shapes=[
            pltpu.VMEM((1, 1), jnp.float32),     # weighted-NLL accumulator
            pltpu.VMEM((1, 1), jnp.float32),     # weight accumulator
        ],
        compiler_params=pltpu.CompilerParams(
            dimension_semantics=("parallel", "arbitrary"),
            vmem_limit_bytes=40 * 1024 * 1024,
        ),
        cost_estimate=cost,
    )(logits, target, tw)

    num = jnp.sum(parts[0::8, 0])
    den = jnp.sum(parts[0::8, 1])
    # TODO(synk): ignore_index / label_smoothing of F.cross_entropy are not
    # used by this module and not implemented.
    return num / den


if __name__ == "__main__":
    key = jax.random.PRNGKey(0)

    def reference(logits, target, class_weight):
        logp = jax.nn.log_softmax(logits.astype(jnp.float32), axis=-1)
        nll = -jnp.take_along_axis(logp, target[:, None], axis=-1)[:, 0]
        w = class_weight[target]
        return jnp.sum(w * nll) / jnp.sum(w)

    # ---- config 1: small shapes consistent with the module spec ----
    N, C = 8, 32
    k1, k2 = jax.random.split(key)
    logits = jax.random.normal(k1, (N, C), dtype=jnp.float32)
    target = jax.random.randint(k2, (N,), 0, C, dtype=jnp.int32)
    class_weight = jnp.linspace(0.5, 1.5, C, dtype=jnp.float32)

    loss = weighted_cross_entropy(logits, target, class_weight)
    jax.block_until_ready(loss)
    loss_ref = reference(logits, target, class_weight)
    assert jnp.allclose(loss, loss_ref, rtol=1e-5, atol=1e-5), (loss, loss_ref)

    # ---- config 2: partial row tiles (N % tn != 0), lane-partial class block
    #      (C % 128 != 0), two splits with clamped over-coverage ----
    N2, C2 = 70, 200
    k3, k4 = jax.random.split(k1)
    logits2 = jax.random.normal(k3, (N2, C2), dtype=jnp.float32)
    target2 = jax.random.randint(k4, (N2,), 0, C2, dtype=jnp.int32)
    class_weight2 = jnp.linspace(0.25, 2.0, C2, dtype=jnp.float32)

    loss2 = weighted_cross_entropy(logits2, target2, class_weight2,
                                   num_splits=2, block_rows=16)
    jax.block_until_ready(loss2)
    loss2_ref = reference(logits2, target2, class_weight2)
    assert jnp.allclose(loss2, loss2_ref, rtol=1e-5, atol=1e-5), (loss2, loss2_ref)

    print("KERNEL_OK")
</pallas_src>

<mosaic_0001>
module attributes {stable_mosaic.version = 11 : i64} {
  func.func @ce_kernel(%arg0: i32, %arg1: i32, %arg2: memref<8x32xf32, #tpu.memory_space<vmem>>, %arg3: memref<8x1xi32, #tpu.memory_space<vmem>>, %arg4: memref<8x1xf32, #tpu.memory_space<vmem>>, %arg5: memref<8x128xf32, #tpu.memory_space<vmem>>, %arg6: memref<1x1xf32, #tpu.memory_space<vmem>>, %arg7: memref<1x1xf32, #tpu.memory_space<vmem>>) attributes {dimension_semantics = [#tpu.dimension_semantics<parallel>, #tpu.dimension_semantics<arbitrary>], iteration_bounds = array<i64: 1, 1>, scalar_prefetch = 0 : i64, scratch_operands = 2 : i64, tpu.core_type = #tpu.core_type<tc>, window_params = [{transform_indices = @transform_0, window_bounds = array<i64: 8, 32>}, {transform_indices = @transform_1, window_bounds = array<i64: 8, 1>}, {transform_indices = @transform_2, window_bounds = array<i64: 8, 1>}, {transform_indices = @transform_3, window_bounds = array<i64: 8, 128>}]} {
    %c0_i32 = arith.constant 0 : i32
    %0 = arith.cmpi eq, %arg1, %c0_i32 : i32
    %1 = arith.extui %0 : i1 to i32
    %c0_i32_0 = arith.constant 0 : i32
    %2 = arith.cmpi ne, %1, %c0_i32_0 : i32
    scf.if %2 {
      %cst_24 = arith.constant 0.000000e+00 : f32
      %49 = vector.broadcast %cst_24 : f32 to vector<1x1xf32>
      %c0_25 = arith.constant 0 : index
      %c0_26 = arith.constant 0 : index
      %50 = vector.load %arg6[%c0_25, %c0_26] : memref<1x1xf32, #tpu.memory_space<vmem>>, vector<1x1xf32>
      tpu.vector_store %arg6[%c0_25, %c0_26], %49 {strides = array<i32>} : memref<1x1xf32, #tpu.memory_space<vmem>>, vector<1x1xf32>,
      %cst_27 = arith.constant 0.000000e+00 : f32
      %51 = vector.broadcast %cst_27 : f32 to vector<1x1xf32>
      %c0_28 = arith.constant 0 : index
      %c0_29 = arith.constant 0 : index
      %52 = vector.load %arg7[%c0_28, %c0_29] : memref<1x1xf32, #tpu.memory_space<vmem>>, vector<1x1xf32>
      tpu.vector_store %arg7[%c0_28, %c0_29], %51 {strides = array<i32>} : memref<1x1xf32, #tpu.memory_space<vmem>>, vector<1x1xf32>,
    } else {
    }
    %c0 = arith.constant 0 : index
    %c0_1 = arith.constant 0 : index
    %3 = vector.load %arg2[%c0, %c0_1] : memref<8x32xf32, #tpu.memory_space<vmem>>, vector<8x32xf32>
    %c0_2 = arith.constant 0 : index
    %c0_3 = arith.constant 0 : index
    %4 = vector.load %arg3[%c0_2, %c0_3] : memref<8x1xi32, #tpu.memory_space<vmem>>, vector<8x1xi32>
    %c0_4 = arith.constant 0 : index
    %c0_5 = arith.constant 0 : index
    %5 = vector.load %arg4[%c0_4, %c0_5] : memref<8x1xf32, #tpu.memory_space<vmem>>, vector<8x1xf32>
    %cst = arith.constant dense<0xFF800000> : vector<8xf32>
    %6 = vector.multi_reduction <maximumf>, %3, %cst [1] : vector<8x32xf32> to vector<8xf32>
    %7 = vector.shape_cast %6 : vector<8xf32> to vector<8x1xf32>
    %8 = vector.broadcast %7 : vector<8x1xf32> to vector<8x32xf32>
    %9 = arith.subf %3, %8 : vector<8x32xf32>
    %10 = math.exp %9 : vector<8x32xf32>
    %cst_6 = arith.constant dense<0.000000e+00> : vector<8xf32>
    %11 = vector.multi_reduction <add>, %10, %cst_6 [1] : vector<8x32xf32> to vector<8xf32>
    %12 = vector.shape_cast %11 : vector<8xf32> to vector<8x1xf32>
    %13 = math.log %12 : vector<8x1xf32>
    %14 = tpu.iota {dimensions = array<i32: 1>} : vector<8x32xi32>
    %15 = vector.broadcast %4 : vector<8x1xi32> to vector<8x32xi32>
    %16 = arith.cmpi eq, %14, %15 : vector<8x32xi32>
    %cst_7 = arith.constant 0.000000e+00 : f32
    %17 = vector.broadcast %cst_7 : f32 to vector<8x32xf32>
    %18 = arith.select %16, %3, %17 : vector<8x32xi1>, vector<8x32xf32>
    %cst_8 = arith.constant dense<0.000000e+00> : vector<8xf32>
    %19 = vector.multi_reduction <add>, %18, %cst_8 [1] : vector<8x32xf32> to vector<8xf32>
    %20 = vector.shape_cast %19 : vector<8xf32> to vector<8x1xf32>
    %21 = arith.addf %7, %13 : vector<8x1xf32>
    %22 = arith.subf %21, %20 : vector<8x1xf32>
    %c1_i32 = arith.constant 1 : i32
    %23 = arith.muli %arg0, %c1_i32 : i32
    %24 = arith.addi %23, %arg1 : i32
    %c8_i32 = arith.constant 8 : i32
    %25 = arith.muli %24, %c8_i32 : i32
    %26 = tpu.iota {dimensions = array<i32: 0>} : vector<8x1xi32>
    %27 = vector.broadcast %25 : i32 to vector<8x1xi32>
    %28 = arith.addi %27, %26 : vector<8x1xi32>
    %c8_i32_9 = arith.constant 8 : i32
    %29 = vector.broadcast %c8_i32_9 : i32 to vector<8x1xi32>
    %30 = arith.cmpi slt, %28, %29 : vector<8x1xi32>
    %cst_10 = arith.constant 0.000000e+00 : f32
    %31 = vector.broadcast %cst_10 : f32 to vector<8x1xf32>
    %32 = arith.select %30, %5, %31 : vector<8x1xi1>, vector<8x1xf32>
    %cst_11 = arith.constant 0.000000e+00 : f32
    %33 = vector.broadcast %cst_11 : f32 to vector<8x1xf32>
    %34 = arith.select %30, %22, %33 : vector<8x1xi1>, vector<8x1xf32>
    %c0_12 = arith.constant 0 : index
    %c0_13 = arith.constant 0 : index
    %35 = vector.load %arg6[%c0_12, %c0_13] : memref<1x1xf32, #tpu.memory_space<vmem>>, vector<1x1xf32>
    %36 = arith.mulf %32, %34 : vector<8x1xf32>
    %cst_14 = arith.constant dense<0.000000e+00> : vector<1xf32>
    %37 = vector.multi_reduction <add>, %36, %cst_14 [0] : vector<8x1xf32> to vector<1xf32>
    %38 = vector.shape_cast %37 : vector<1xf32> to vector<1x1xf32>
    %39 = arith.addf %35, %38 : vector<1x1xf32>
    %c0_15 = arith.constant 0 : index
    %c0_16 = arith.constant 0 : index
    %40 = vector.load %arg6[%c0_15, %c0_16] : memref<1x1xf32, #tpu.memory_space<vmem>>, vector<1x1xf32>
    tpu.vector_store %arg6[%c0_15, %c0_16], %39 {strides = array<i32>} : memref<1x1xf32, #tpu.memory_space<vmem>>, vector<1x1xf32>,
    %c0_17 = arith.constant 0 : index
    %c0_18 = arith.constant 0 : index
    %41 = vector.load %arg7[%c0_17, %c0_18] : memref<1x1xf32, #tpu.memory_space<vmem>>, vector<1x1xf32>
    %cst_19 = arith.constant dense<0.000000e+00> : vector<1xf32>
    %42 = vector.multi_reduction <add>, %32, %cst_19 [0] : vector<8x1xf32> to vector<1xf32>
    %43 = vector.shape_cast %42 : vector<1xf32> to vector<1x1xf32>
    %44 = arith.addf %41, %43 : vector<1x1xf32>
    %c0_20 = arith.constant 0 : index
    %c0_21 = arith.constant 0 : index
    %45 = vector.load %arg7[%c0_20, %c0_21] : memref<1x1xf32, #tpu.memory_space<vmem>>, vector<1x1xf32>
    tpu.vector_store %arg7[%c0_20, %c0_21], %44 {strides = array<i32>} : memref<1x1xf32, #tpu.memory_space<vmem>>, vector<1x1xf32>,
    %c0_i32_22 = arith.constant 0 : i32
    %46 = arith.cmpi eq, %arg1, %c0_i32_22 : i32
    %47 = arith.extui %46 : i1 to i32
    %c0_i32_23 = arith.constant 0 : i32
    %48 = arith.cmpi ne, %47, %c0_i32_23 : i32
    scf.if %48 {
      %49 = tpu.iota {dimensions = array<i32: 0>} : vector<8x128xi32>
      %50 = tpu.iota {dimensions = array<i32: 1>} : vector<8x128xi32>
      %c0_i32_24 = arith.constant 0 : i32
      %51 = vector.broadcast %c0_i32_24 : i32 to vector<8x128xi32>
      %52 = arith.cmpi eq, %49, %51 : vector<8x128xi32>
      %c0_i32_25 = arith.constant 0 : i32
      %53 = vector.broadcast %c0_i32_25 : i32 to vector<8x128xi32>
      %54 = arith.cmpi eq, %50, %53 : vector<8x128xi32>
      %55 = arith.andi %52, %54 : vector<8x128xi1>
      %c0_26 = arith.constant 0 : index
      %c0_27 = arith.constant 0 : index
      %56 = vector.load %arg6[%c0_26, %c0_27] : memref<1x1xf32, #tpu.memory_space<vmem>>, vector<1x1xf32>
      %cst_28 = arith.constant 0.000000e+00 : f32
      %57 = vector.shape_cast %56 : vector<1x1xf32> to vector<1x1xf32>
      %58 = vector.broadcast %57 : vector<1x1xf32> to vector<8x128xf32>
      %59 = vector.broadcast %cst_28 : f32 to vector<8x128xf32>
      %60 = arith.select %55, %58, %59 : vector<8x128xi1>, vector<8x128xf32>
      %c0_i32_29 = arith.constant 0 : i32
      %61 = vector.broadcast %c0_i32_29 : i32 to vector<8x128xi32>
      %62 = arith.cmpi eq, %49, %61 : vector<8x128xi32>
      %c1_i32_30 = arith.constant 1 : i32
      %63 = vector.broadcast %c1_i32_30 : i32 to vector<8x128xi32>
      %64 = arith.cmpi eq, %50, %63 : vector<8x128xi32>
      %65 = arith.andi %62, %64 : vector<8x128xi1>
      %c0_31 = arith.constant 0 : index
      %c0_32 = arith.constant 0 : index
      %66 = vector.load %arg7[%c0_31, %c0_32] : memref<1x1xf32, #tpu.memory_space<vmem>>, vector<1x1xf32>
      %cst_33 = arith.constant 0.000000e+00 : f32
      %67 = vector.shape_cast %66 : vector<1x1xf32> to vector<1x1xf32>
      %68 = vector.broadcast %67 : vector<1x1xf32> to vector<8x128xf32>
      %69 = vector.broadcast %cst_33 : f32 to vector<8x128xf32>
      %70 = arith.select %65, %68, %69 : vector<8x128xi1>, vector<8x128xf32>
      %71 = arith.addf %60, %70 : vector<8x128xf32>
      %c0_34 = arith.constant 0 : index
      %c0_35 = arith.constant 0 : index
      %72 = vector.load %arg5[%c0_34, %c0_35] : memref<8x128xf32, #tpu.memory_space<vmem>>, vector<8x128xf32>
      tpu.vector_store %arg5[%c0_34, %c0_35], %71 {strides = array<i32>} : memref<8x128xf32, #tpu.memory_space<vmem>>, vector<8x128xf32>,
    } else {
    }
    return
  }
  func.func @transform_0(%arg0: i32, %arg1: i32) -> (i32, i32) {
    %c1_i32 = arith.constant 1 : i32
    %0 = arith.muli %arg0, %c1_i32 : i32
    %1 = arith.addi %0, %arg1 : i32
    %c0_i32 = arith.constant 0 : i32
    %2 = arith.minsi %1, %c0_i32 : i32
    %c0_i32_0 = arith.constant 0 : i32
    %c0_i32_1 = arith.constant 0 : i32
    return %2, %c0_i32_0 : i32, i32
  }
  func.func @transform_1(%arg0: i32, %arg1: i32) -> (i32, i32) {
    %c1_i32 = arith.constant 1 : i32
    %0 = arith.muli %arg0, %c1_i32 : i32
    %1 = arith.addi %0, %arg1 : i32
    %c0_i32 = arith.constant 0 : i32
    %2 = arith.minsi %1, %c0_i32 : i32
    %c0_i32_0 = arith.constant 0 : i32
    %c0_i32_1 = arith.constant 0 : i32
    return %2, %c0_i32_0 : i32, i32
  }
  func.func @transform_2(%arg0: i32, %arg1: i32) -> (i32, i32) {
    %c1_i32 = arith.constant 1 : i32
    %0 = arith.muli %arg0, %c1_i32 : i32
    %1 = arith.addi %0, %arg1 : i32
    %c0_i32 = arith.constant 0 : i32
    %2 = arith.minsi %1, %c0_i32 : i32
    %c0_i32_0 = arith.constant 0 : i32
    %c0_i32_1 = arith.constant 0 : i32
    return %2, %c0_i32_0 : i32, i32
  }
  func.func @transform_3(%arg0: i32, %arg1: i32) -> (i32, i32) {
    %c0_i32 = arith.constant 0 : i32
    %c0_i32_0 = arith.constant 0 : i32
    return %arg0, %c0_i32 : i32, i32
  }
}

</mosaic_0001>

<llo_original>
// kernel: tpu_custom_call.1
$region0: #{tpu_custom_call.1}
  #allocation0 [shape = 'u32[]', space=smem, size = 0x4, offset = 0x4, fixed_abs, tag = 'smem constant byte address 0x4 - core index']
  #allocation1 [shape = 'u32[144,128]{1,0:T(1,128)}', space=vmem, size = 0x12000, scoped, tag = 'internal scratch']
  #allocation2 [shape = 'f32[1,1]{1,0:T(1,128)}', space=vmem, size = 0x200, scoped, tag = 'scratch operand']
  #allocation3 [shape = 'f32[1,1]{1,0:T(1,128)}', space=vmem, size = 0x200, scoped, tag = 'scratch operand']
  %s0 = inlined_call_operand.vmem [shape: f32[8,32], index: 0, kind: input, shape index: {}]
  %s1 = inlined_call_operand.vmem [shape: s32[8,1], index: 1, kind: input, shape index: {}]
  %s2 = inlined_call_operand.vmem [shape: f32[8,1], index: 2, kind: input, shape index: {}]
  %s3 = inlined_call_operand.hbm [shape: f32[8,128], index: 3, kind: output, shape index: {}]
  %s4 = sld [smem:[#allocation0]]
  $region30: #{tpu_custom_call.1} parent=0
    _
  %s6 = ssub.s32 1, %s4
  %s7 = scalar_select 0, %s6, %s4
  $region1: #{tpu_custom_call.1} parent=0
    #allocation4 [shape = 'u8[4096]{0}', space=vmem, size = 0x1000, scoped, tag = 'output window, operand 0, single buffered']
    #allocation5 [shape = 's32[1]{0}', space=sflag, size = 0x4, scoped, tag = 'scoped memory for tpu_custom_call.1']
    %8 = vsyncpa [#allocation5], 0
    // Predicated region
    $region2: #{tpu_custom_call.1} parent=1 // pred_check
      _
    $region3: #{tpu_custom_call.1} parent=1 // pred_check_branch
      %10 = sbr.rel (0) target = $region5
    $region4: #{tpu_custom_call.1} parent=1 // pred_region
      %s11 = sadd.s32 0, 0
      %p12 = scmp.lt.s32.totalorder %s11, 0
      %s13 = scalar_select %p12, %s11, 0
      %p14 = scmp.lt.s32.totalorder %s13, 0
      %s15 = scalar_select %p14, %s13, 0
      %s16 = smul.addr %s15, 8
      %s17 = scalar_lea.vmem %s0, %s16
      %s18 = sadd.s32 0, 0
      %p19 = scmp.lt.s32.totalorder %s18, 0
      %s20 = scalar_select %p19, %s18, 0
    $region5: #{tpu_custom_call.1} parent=1 // pred_fallthru
      _
    // Predicated region
    $region6: #{tpu_custom_call.1} parent=1 // pred_check
      _
    $region7: #{tpu_custom_call.1} parent=1 // pred_check_branch
      %22 = sbr.rel (0) target = $region9
    $region8: #{tpu_custom_call.1} parent=1 // pred_region
      %s23 = sadd.s32 0, 0
      %p24 = scmp.lt.s32.totalorder %s23, 0
      %s25 = scalar_select %p24, %s23, 0
      %p26 = scmp.lt.s32.totalorder %s25, 0
      %s27 = scalar_select %p26, %s25, 0
      %s28 = smul.addr %s27, 8
      %s29 = scalar_lea.vmem %s1, %s28
      %s30 = sadd.s32 0, 0
      %p31 = scmp.lt.s32.totalorder %s30, 0
      %s32 = scalar_select %p31, %s30, 0
    $region9: #{tpu_custom_call.1} parent=1 // pred_fallthru
      _
    // Predicated region
    $region10: #{tpu_custom_call.1} parent=1 // pred_check
      _
    $region11: #{tpu_custom_call.1} parent=1 // pred_check_branch
      %34 = sbr.rel (0) target = $region13
    $region12: #{tpu_custom_call.1} parent=1 // pred_region
      %s35 = sadd.s32 0, 0
      %p36 = scmp.lt.s32.totalorder %s35, 0
      %s37 = scalar_select %p36, %s35, 0
      %p38 = scmp.lt.s32.totalorder %s37, 0
      %s39 = scalar_select %p38, %s37, 0
      %s40 = smul.addr %s39, 8
      %s41 = scalar_lea.vmem %s2, %s40
      %s42 = sadd.s32 0, 0
      %p43 = scmp.lt.s32.totalorder %s42, 0
      %s44 = scalar_select %p43, %s42, 0
    $region13: #{tpu_custom_call.1} parent=1 // pred_fallthru
      _
    %s45 = sadd.s32 0, 0
    %p46 = scmp.lt.s32.totalorder %s45, 0
    %s47 = scalar_select %p46, %s45, 0
    %p48 = scmp.lt.s32.totalorder %s47, 0
    %s49 = scalar_select %p48, %s47, 0
    %s50 = smul.addr %s49, 8
    %s51 = scalar_lea.vmem %s0, %s50
    %s52 = sadd.s32 0, 0
    %p53 = scmp.lt.s32.totalorder %s52, 0
    %s54 = scalar_select %p53, %s52, 0
    %p55 = scmp.lt.s32.totalorder %s54, 0
    %s56 = scalar_select %p55, %s54, 0
    %s57 = smul.addr %s56, 8
    %s58 = scalar_lea.vmem %s1, %s57
    %s59 = sadd.s32 0, 0
    %p60 = scmp.lt.s32.totalorder %s59, 0
    %s61 = scalar_select %p60, %s59, 0
    %p62 = scmp.lt.s32.totalorder %s61, 0
    %s63 = scalar_select %p62, %s61, 0
    %s64 = smul.addr %s63, 8
    %s65 = scalar_lea.vmem %s2, %s64
    %s66 = sadd.s32 0, 0
    %p67 = scmp.lt.s32.totalorder %s66, 0
    %s68 = scalar_select %p67, %s66, 0
    %p69 = scmp.lt.s32.totalorder %s68, 0
    %s70 = scalar_select %p69, %s68, 0
    %s71 = smul.addr %s70, 8
    %s72 = scalar_lea.vmem %s0, %s71
    %s73 = sadd.s32 0, 0
    %p74 = scmp.lt.s32.totalorder %s73, 0
    %s75 = scalar_select %p74, %s73, 0
    %s76 = sadd.s32 0, 0
    %p77 = scmp.lt.s32.totalorder %s76, 0
    %s78 = scalar_select %p77, %s76, 0
    %p79 = scmp.lt.s32.totalorder %s78, 0
    %s80 = scalar_select %p79, %s78, 0
    %s81 = smul.addr %s80, 8
    %s82 = scalar_lea.vmem %s1, %s81
    %s83 = sadd.s32 0, 0
    %p84 = scmp.lt.s32.totalorder %s83, 0
    %s85 = scalar_select %p84, %s83, 0
    %s86 = sadd.s32 0, 0
    %p87 = scmp.lt.s32.totalorder %s86, 0
    %s88 = scalar_select %p87, %s86, 0
    %p89 = scmp.lt.s32.totalorder %s88, 0
    %s90 = scalar_select %p89, %s88, 0
    %s91 = smul.addr %s90, 8
    %s92 = scalar_lea.vmem %s2, %s91
    %s93 = sadd.s32 0, 0
    %p94 = scmp.lt.s32.totalorder %s93, 0
    %s95 = scalar_select %p94, %s93, 0
    %p96 = scmp.eq.s32.totalorder 0, 0
    // Predicated region
    $region14: #{tpu_custom_call.1} parent=1 // pred_check
      %p97 = pneg %p96
    $region15: #{tpu_custom_call.1} parent=1 // pred_check_branch
      %99 = sbr.rel (%p97) target = $region17
    $region16: #{tpu_custom_call.1} parent=1 // pred_region
      %vm100 = vcmask 0
      %101 = vst.msk [vmem:[#allocation2] sm:$0x1] %vm100, 0.0
      %102 = vst.msk [vmem:[#allocation3] sm:$0x1] %vm100, 0.0
    $region17: #{tpu_custom_call.1} parent=1 // pred_fallthru
      _
    %v103 = vld [vmem:[%s72] sm:$0xff]
    %v104 = vld [vmem:[%s82] sm:$0xff]
    %v105 = vld [vmem:[%s92] sm:$0xff]
    %vm106 = vcmask 261120
    %v107 = vsel %vm106, %v103, -inf
    %108 = vmax.xlane.f32.xlu0 %v107
    %v109 = vpop.xlane.xlu0 %108
    %v110 = vsub.f32 %v103, %v109
    %v111 = vmul.f32 %v110, 1.442695
    %v112 = vpow.pop %v111
    %v113 = vsel %vm106, %v112, 0.0
    %114 = vadd.xlane.f32.xlu0 %v113
    %v115 = vpop.xlane.xlu0 %114
    %v116 = vlog2.pop %v115
    %v117 = vmul.f32 %v116, 0.6931472
    %v118 = vlaneseq
    %v119 = vand.u32 %v118, 127
    %120 = vset.pattern.permute.xlu0 0
    %121 = vperm.xlu0 %120, %v104
    %v122 = vpop.permute.xlu0 %121
    %vm123 = vcmp.eq.s32.totalorder %v119, %v122
    %v124 = vsel %vm123, %v103, 0.0
    %v125 = vsel %vm106, %v124, 0.0
    %126 = vadd.xlane.f32.xlu0 %v125
    %v127 = vpop.xlane.xlu0 %126
    %v128 = vadd.f32 %v109, %v117
    %v129 = vsub.f32 %v128, %v127
    %s130 = sadd.s32 0, 0
    %s131 = smul.u32 %s130, 8
    %v132 = vlaneseq
    %v133 = vshrl.u32 %v132, 7
    %v134 = vstv %s131
    %v135 = vadd.s32 %v134, %v133
    %vm136 = vcmp.lt.s32.totalorder %v135, 8
    %v137 = vsel %vm136, %v105, 0.0
    %v138 = vsel %vm136, %v129, 0.0
    %v139 = vld [vmem:[#allocation2] sm:$0x1]
    %v140 = vmul.f32 %v137, %v138
    %vm141 = vcmask 7168
    %v142 = vsel %vm141, %v140, 0.0
    %v143 = vrot.slane %v142, 4
    %v144 = vadd.f32 %v142, %v143
    %v145 = vrot.slane %v144, 2
    %v146 = vadd.f32 %v144, %v145
    %v147 = vrot.slane %v146, 1
    %v148 = vadd.f32 %v146, %v147
    %v149 = vadd.f32 %v139, %v148
    %vm150 = vcmask 0
    %151 = vst.msk [vmem:[#allocation2] sm:$0x1] %vm150, %v149
    %v152 = vld [vmem:[#allocation3] sm:$0x1]
    %v153 = vsel %vm141, %v137, 0.0
    %v154 = vrot.slane %v153, 4
    %v155 = vadd.f32 %v153, %v154
    %v156 = vrot.slane %v155, 2
    %v157 = vadd.f32 %v155, %v156
    %v158 = vrot.slane %v157, 1
    %v159 = vadd.f32 %v157, %v158
    %v160 = vadd.f32 %v152, %v159
    %161 = vst.msk [vmem:[#allocation3] sm:$0x1] %vm150, %v160
    // Predicated region
    $region18: #{tpu_custom_call.1} parent=1 // pred_check
      %p162 = pneg %p96
    $region19: #{tpu_custom_call.1} parent=1 // pred_check_branch
      %164 = sbr.rel (%p162) target = $region21
    $region20: #{tpu_custom_call.1} parent=1 // pred_region
      %vm165 = vcmp.eq.s32.totalorder %v133, 0
      %vm166 = vcmp.eq.s32.totalorder %v119, 0
      %vm167 = vmand %vm165, %vm166
      %v168 = vld [vmem:[#allocation2] sm:$0x1]
      %v170 = vlaneseq
      %v171 = vshrl.u32 %v170, 7
      %v172 = vsub.s32 0, %v171
      %v173 = vrot.slane %v168, %v172
      %174 = vset.pattern.permute.xlu0 0
      %175 = vperm.xlu0 %174, %v173
      %v176 = vpop.permute.xlu0 %175
      %v178 = vsel %vm167, %v176, 0.0
      %vm179 = vcmp.eq.s32.totalorder %v119, 1
      %vm180 = vmand %vm165, %vm179
      %v181 = vld [vmem:[#allocation3] sm:$0x1]
      %v183 = vlaneseq
      %v184 = vshrl.u32 %v183, 7
      %v185 = vsub.s32 0, %v184
      %v186 = vrot.slane %v181, %v185
      %187 = vset.pattern.permute.xlu0 0
      %188 = vperm.xlu0 %187, %v186
      %v189 = vpop.permute.xlu0 %188
      %v191 = vsel %vm180, %v189, 0.0
      %v192 = vadd.f32 %v178, %v191
      %193 = vst [vmem:[#allocation4] sm:$0xff] %v192
    $region21: #{tpu_custom_call.1} parent=1 // pred_fallthru
      _
    // Predicated region
    $region22: #{tpu_custom_call.1} parent=1 // pred_check
      _
    $region23: #{tpu_custom_call.1} parent=1 // pred_check_branch
      %195 = sbr.rel (0) target = $region25
    $region24: #{tpu_custom_call.1} parent=1 // pred_region
      %s197 = ssub.s32 128, 128
      %198 = vsyncadd [#allocation5], %s197
      %s200 = sshll.u32 [#allocation4], 4
      %s201 = int_to_ptr.vmem [resolvable:$true] %s200
      %203 = dma.vmem_to_hbm [thread:$0]  %s201, 128, %s3, [#allocation5]
    $region25: #{tpu_custom_call.1} parent=1 // pred_fallthru
      _
    // Predicated region
    $region26: #{tpu_custom_call.1} parent=1 // pred_check
      _
    $region27: #{tpu_custom_call.1} parent=1 // pred_check_branch
      %205 = sbr.rel (0) target = $region29
    $region28: #{tpu_custom_call.1} parent=1 // pred_region
      %206 = dma.done [#allocation5], 128
    $region29: #{tpu_custom_call.1} parent=1 // pred_fallthru
      _
    %207 = vsyncpa [#allocation5], 1

</llo_original>
